<compile_context>
chip_gen: v7x
topology: tpu7x:2x2x1
jax: 0.10.0
libtpu: 0.0.40
codegen_flags: <defaults>
</compile_context>

<pallas_src>
import jax
import jax.numpy as jnp
from jax.experimental import pallas as pl
from jax.experimental.pallas import tpu as pltpu

VOCAB = 128        # stand-in for len(words)  # TODO(synk): real vocab size from words.json
HIDDEN = 100       # fc1 out_features (logical)
HIDDEN_PAD = 128   # lane-dense padded hidden size
OUT = 1            # fc2 out_features
MAX_TB = 512       # max batch rows per grid step (sweepable)
CHUNK = 128        # output lane columns fused per inner step


def _nn_kernel(x_ref, w1_ref, b1w2_ref, b2_ref, o_ref):
    # x:    (TB, V)  input tile in caller dtype (rows = batch examples)
    # w1:   (HP, V)  bf16, PyTorch (out, in) layout, zero-padded rows
    # b1w2: (HP, 2)  f32; [:, 0] = b1, [:, 1] = fc2 weight column (padded)
    # b2:   (1,)     f32 scalar in SMEM
    # o:    (1, TB)  lane-dense output row (one sigmoid per example)
    w1 = w1_ref[...]                      # resident weights, hoisted out of the loop
    b1 = b1w2_ref[:, 0:1]                 # (HP, 1)
    w2 = b1w2_ref[:, 1:2]                 # (HP, 1)
    b2 = b2_ref[0]

    tb = o_ref.shape[1]                   # static tile width
    step = min(CHUNK, tb)
    # Static chunk loop: fuse fc1 -> +b1 -> ReLU -> fc2-reduce -> sigmoid per
    # 128-wide chunk so the f32 intermediate stays in vregs (no VMEM spill).
    for off in range(0, tb, step):
        n = min(step, tb - off)
        x_c = x_ref[off:off + n, :].astype(jnp.bfloat16)          # (n, V)
        # fc1 in transposed space: hT[j, b] = sum_v W1[j, v] * x[b, v]
        h_t = jax.lax.dot_general(
            w1, x_c,
            dimension_numbers=(((1,), (1,)), ((), ())),
            preferred_element_type=jnp.float32)                    # (HP, n) on MXU
        h_t = jnp.maximum(h_t + b1, 0.0)                           # bias + ReLU (VPU, f32)
        # fc2: VPU broadcast-multiply + XLU sublane sum; MXU stays idle here.
        z = jnp.sum(h_t * w2, axis=0, keepdims=True) + b2          # (1, n)
        o_ref[:, off:off + n] = jax.nn.sigmoid(z).astype(o_ref.dtype)


def prepare_params(w1, b1, w2, b2, hidden_pad=HIDDEN_PAD):
    """One-time (model-init) packing.  PyTorch layouts in:
       w1: (HIDDEN, VOCAB), b1: (HIDDEN,), w2: (OUT, HIDDEN), b2: (OUT,)."""
    h, _ = w1.shape
    pad = hidden_pad - h
    w1p = jnp.pad(jnp.asarray(w1, jnp.float32),
                  ((0, pad), (0, 0))).astype(jnp.bfloat16)           # (HP, V) bf16
    b1p = jnp.pad(jnp.asarray(b1, jnp.float32), (0, pad))            # (HP,)
    w2p = jnp.pad(jnp.asarray(w2, jnp.float32).reshape(h), (0, pad)) # (HP,)
    b1w2 = jnp.stack([b1p, w2p], axis=1)                             # (HP, 2) f32
    b2p = jnp.asarray(b2, jnp.float32).reshape(1)                    # (1,)    f32
    return w1p, b1w2, b2p


def _choose_tb(b, max_tb=MAX_TB):
    """Batch-tile width: lane-dense and large (amortize per-step overhead),
    but <= ~half the batch so v7x's two TensorCores both get grid steps."""
    if b <= 128:
        return b                                   # whole batch, exact block
    half = pl.cdiv(pl.cdiv(b, 2), 128) * 128       # >= 2 grid steps
    return min(max_tb, half)


def nn_forward(x, params, max_tb=MAX_TB):
    """x: (B, VOCAB) in any float/int dtype.  Returns (B, 1) f32."""
    w1p, b1w2, b2p = params
    hp, v = w1p.shape
    x = jnp.asarray(x)                 # no dtype cast: avoid an extra HBM copy
    b = x.shape[0]

    tb = _choose_tb(b, max_tb)
    grid = pl.cdiv(b, tb)

    cost = pl.CostEstimate(
        flops=b * (2 * v * hp + 3 * hp),
        transcendentals=b,                                  # one sigmoid per example
        bytes_accessed=(x.size * jnp.dtype(x.dtype).itemsize
                        + w1p.size * 2 + b1w2.size * 4 + b * 4))

    out = pl.pallas_call(
        _nn_kernel,
        out_shape=jax.ShapeDtypeStruct((1, b), jnp.float32),
        grid_spec=pltpu.PrefetchScalarGridSpec(
            num_scalar_prefetch=0,
            grid=(grid,),
            in_specs=[
                pl.BlockSpec((tb, v), lambda i: (i, 0)),    # x: batch-tiled
                pl.BlockSpec((hp, v), lambda i: (0, 0)),    # W1: resident
                pl.BlockSpec((hp, 2), lambda i: (0, 0)),    # [b1 | w2]: resident
                pl.BlockSpec(memory_space=pltpu.MemorySpace.SMEM),  # b2 scalar
            ],
            out_specs=pl.BlockSpec((1, tb), lambda i: (0, i)),      # lane-dense row
        ),
        compiler_params=pltpu.CompilerParams(
            dimension_semantics=("parallel",)),
        cost_estimate=cost,
    )(x, w1p, b1w2, b2p)

    return out[0][:, None]             # back to PyTorch's (B, 1)


def _reference(x, w1, b1, w2, b2):
    h = jnp.maximum(jnp.asarray(x, jnp.float32) @ w1.T + b1, 0.0)
    return jax.nn.sigmoid(h @ w2.T + b2)


if __name__ == "__main__":
    key = jax.random.PRNGKey(0)
    kx, k1, k2, k3, k4, kx2, kx3 = jax.random.split(key, 7)

    # Deterministic synthetic parameters (PyTorch Linear shapes).
    w1 = jax.random.normal(k1, (HIDDEN, VOCAB), jnp.float32) * 0.05
    b1 = jax.random.normal(k2, (HIDDEN,), jnp.float32) * 0.05
    w2 = jax.random.normal(k3, (OUT, HIDDEN), jnp.float32) * 0.05
    b2 = jax.random.normal(k4, (OUT,), jnp.float32) * 0.05
    params = prepare_params(w1, b1, w2, b2)

    # Small batch: exact (non-padded) single block.
    B = 2
    x = jax.random.uniform(kx, (B, VOCAB), jnp.float32)
    y = nn_forward(x, params)
    jax.block_until_ready(y)
    assert y.shape == (B, OUT), y.shape
    assert jnp.allclose(y, _reference(x, w1, b1, w2, b2), atol=5e-3, rtol=0.0)

    # Ragged batch: 2 grid steps, trailing partial block, multi-chunk body.
    B2 = 261
    x2 = jax.random.uniform(kx2, (B2, VOCAB), jnp.float32)
    y2 = nn_forward(x2, params)
    jax.block_until_ready(y2)
    assert y2.shape == (B2, OUT), y2.shape
    assert jnp.allclose(y2, _reference(x2, w1, b1, w2, b2), atol=5e-3, rtol=0.0)

    # Large even batch: TB=512, 2 parallel grid steps, 4 fused chunks/step.
    B3 = 1024
    x3 = jax.random.uniform(kx3, (B3, VOCAB), jnp.float32)
    y3 = nn_forward(x3, params)
    jax.block_until_ready(y3)
    assert y3.shape == (B3, OUT), y3.shape
    assert jnp.allclose(y3, _reference(x3, w1, b1, w2, b2), atol=5e-3, rtol=0.0)

    print("KERNEL_OK")
</pallas_src>

<mosaic_0001>
module attributes {stable_mosaic.version = 11 : i64} {
  func.func @_nn_kernel(%arg0: i32, %arg1: memref<2x128xf32, #tpu.memory_space<vmem>>, %arg2: memref<128x128xbf16, #tpu.memory_space<vmem>>, %arg3: memref<128x2xf32, #tpu.memory_space<vmem>>, %arg4: memref<1xf32, #tpu.memory_space<smem>>, %arg5: memref<1x2xf32, #tpu.memory_space<vmem>>) attributes {dimension_semantics = [#tpu.dimension_semantics<parallel>], iteration_bounds = array<i64: 1>, scalar_prefetch = 0 : i64, scratch_operands = 0 : i64, tpu.core_type = #tpu.core_type<tc>, window_params = [{transform_indices = @transform_0, window_bounds = array<i64: 2, 128>}, {pipeline_mode = #tpu.pipeline_mode<synchronous>, transform_indices = @transform_1, window_bounds = array<i64: 128, 128>}, {pipeline_mode = #tpu.pipeline_mode<synchronous>, transform_indices = @transform_2, window_bounds = array<i64: 128, 2>}, {transform_indices = @transform_3, window_bounds = array<i64: 1>}, {transform_indices = @transform_4, window_bounds = array<i64: 1, 2>}]} {
    %c0 = arith.constant 0 : index
    %c0_0 = arith.constant 0 : index
    %0 = vector.load %arg2[%c0, %c0_0] : memref<128x128xbf16, #tpu.memory_space<vmem>>, vector<128x128xbf16>
    %c0_1 = arith.constant 0 : index
    %c0_2 = arith.constant 0 : index
    %1 = vector.load %arg3[%c0_1, %c0_2] : memref<128x2xf32, #tpu.memory_space<vmem>>, vector<128x1xf32>
    %c0_3 = arith.constant 0 : index
    %c1 = arith.constant 1 : index
    %2 = vector.load %arg3[%c0_3, %c1] : memref<128x2xf32, #tpu.memory_space<vmem>>, vector<128x1xf32>
    %c0_4 = arith.constant 0 : index
    %3 = memref.load %arg4[%c0_4] : memref<1xf32, #tpu.memory_space<smem>>
    %c0_5 = arith.constant 0 : index
    %c0_6 = arith.constant 0 : index
    %4 = vector.load %arg1[%c0_5, %c0_6] : memref<2x128xf32, #tpu.memory_space<vmem>>, vector<2x128xf32>
    %5 = arith.truncf %4 : vector<2x128xf32> to vector<2x128xbf16>
    %cst = arith.constant dense<0.000000e+00> : vector<128x2xf32>
    %6 = tpu.matmul %0, %5, %cst {dimension_numbers = #tpu.dot_dimension_numbers<[1], [1], [0], [0], [0, 0, 1, 0], [], []>} : vector<128x128xbf16>, vector<2x128xbf16>, vector<128x2xf32> -> vector<128x2xf32>
    %7 = vector.broadcast %1 : vector<128x1xf32> to vector<128x2xf32>
    %8 = arith.addf %6, %7 : vector<128x2xf32>
    %cst_7 = arith.constant 0.000000e+00 : f32
    %9 = vector.broadcast %cst_7 : f32 to vector<128x2xf32>
    %10 = arith.maximumf %8, %9 : vector<128x2xf32>
    %11 = vector.broadcast %2 : vector<128x1xf32> to vector<128x2xf32>
    %12 = arith.mulf %10, %11 : vector<128x2xf32>
    %cst_8 = arith.constant dense<0.000000e+00> : vector<2xf32>
    %13 = vector.multi_reduction <add>, %12, %cst_8 [0] : vector<128x2xf32> to vector<2xf32>
    %14 = vector.shape_cast %13 : vector<2xf32> to vector<1x2xf32>
    %15 = vector.broadcast %3 : f32 to vector<1x2xf32>
    %16 = arith.addf %14, %15 : vector<1x2xf32>
    %17 = arith.negf %16 : vector<1x2xf32>
    %18 = math.exp %17 : vector<1x2xf32>
    %cst_9 = arith.constant 1.000000e+00 : f32
    %19 = vector.broadcast %cst_9 : f32 to vector<1x2xf32>
    %20 = arith.addf %19, %18 : vector<1x2xf32>
    %21 = arith.divf %19, %20 : vector<1x2xf32>
    %c0_10 = arith.constant 0 : index
    %c0_11 = arith.constant 0 : index
    %22 = vector.load %arg5[%c0_10, %c0_11] : memref<1x2xf32, #tpu.memory_space<vmem>>, vector<1x2xf32>
    tpu.vector_store %arg5[%c0_10, %c0_11], %21 {strides = array<i32>} : memref<1x2xf32, #tpu.memory_space<vmem>>, vector<1x2xf32>,
    return
  }
  func.func @transform_0(%arg0: i32) -> (i32, i32) {
    %c0_i32 = arith.constant 0 : i32
    %c0_i32_0 = arith.constant 0 : i32
    return %arg0, %c0_i32 : i32, i32
  }
  func.func @transform_1(%arg0: i32) -> (i32, i32) {
    %c0_i32 = arith.constant 0 : i32
    %c0_i32_0 = arith.constant 0 : i32
    %c0_i32_1 = arith.constant 0 : i32
    return %c0_i32, %c0_i32_0 : i32, i32
  }
  func.func @transform_2(%arg0: i32) -> (i32, i32) {
    %c0_i32 = arith.constant 0 : i32
    %c0_i32_0 = arith.constant 0 : i32
    %c0_i32_1 = arith.constant 0 : i32
    return %c0_i32, %c0_i32_0 : i32, i32
  }
  func.func @transform_3(%arg0: i32) -> i32 {
    %c0_i32 = arith.constant 0 : i32
    %c0_i32_0 = arith.constant 0 : i32
    return %c0_i32 : i32
  }
  func.func @transform_4(%arg0: i32) -> (i32, i32) {
    %c0_i32 = arith.constant 0 : i32
    %c0_i32_0 = arith.constant 0 : i32
    return %c0_i32, %arg0 : i32, i32
  }
}

</mosaic_0001>

<llo_original>
// kernel: tpu_custom_call.1
$region0: #{tpu_custom_call.1}
  #allocation0 [shape = 'u32[]', space=smem, size = 0x4, offset = 0x4, fixed_abs, tag = 'smem constant byte address 0x4 - core index']
  #allocation1 [shape = 'u32[144,128]{1,0:T(1,128)}', space=vmem, size = 0x12000, scoped, tag = 'internal scratch']
  #allocation2 [shape = 'f32[1]{0:T(128)S(6)}', space=smem, size = 0x200, scoped, tag = 'scoped memory for tpu_custom_call.1']
  %s0 = inlined_call_operand.vmem [shape: f32[2,128], index: 0, kind: input, shape index: {}]
  %s1 = inlined_call_operand.vmem [shape: bf16[128,128], index: 1, kind: input, shape index: {}]
  %s2 = inlined_call_operand.vmem [shape: f32[128,2], index: 2, kind: input, shape index: {}]
  %s3 = inlined_call_operand.<no memory space> [shape: f32[1], index: 3, kind: input, shape index: {}]
  %s4 = inlined_call_operand.hbm [shape: f32[1,2], index: 4, kind: output, shape index: {}]
  %s5 = sld [smem:[#allocation0]]
  $region26: #{tpu_custom_call.1} parent=0
    _
  %s7 = ssub.s32 1, %s5
  %s8 = scalar_select 0, %s7, %s5
  %9 = sst [smem:[#allocation2]] %s3
  $region1: #{tpu_custom_call.1} parent=0
    #allocation3 [shape = 'u8[512]{0}', space=vmem, size = 0x400, scoped, tag = 'output window, operand 0, single buffered']
    #allocation4 [shape = 's32[1]{0}', space=sflag, size = 0x4, scoped, tag = 'scoped memory for tpu_custom_call.1']
    %10 = vsyncpa [#allocation4], 0
    // Predicated region
    $region2: #{tpu_custom_call.1} parent=1 // pred_check
      _
    $region3: #{tpu_custom_call.1} parent=1 // pred_check_branch
      %12 = sbr.rel (0) target = $region5
    $region4: #{tpu_custom_call.1} parent=1 // pred_region
      _
    $region5: #{tpu_custom_call.1} parent=1 // pred_fallthru
      _
    // Predicated region
    $region6: #{tpu_custom_call.1} parent=1 // pred_check
      _
    $region7: #{tpu_custom_call.1} parent=1 // pred_check_branch
      %14 = sbr.rel (0) target = $region9
    $region8: #{tpu_custom_call.1} parent=1 // pred_region
      _
    $region9: #{tpu_custom_call.1} parent=1 // pred_fallthru
      _
    // Predicated region
    $region10: #{tpu_custom_call.1} parent=1 // pred_check
      _
    $region11: #{tpu_custom_call.1} parent=1 // pred_check_branch
      %16 = sbr.rel (0) target = $region13
    $region12: #{tpu_custom_call.1} parent=1 // pred_region
      _
    $region13: #{tpu_custom_call.1} parent=1 // pred_fallthru
      _
    // Predicated region
    $region14: #{tpu_custom_call.1} parent=1 // pred_check
      _
    $region15: #{tpu_custom_call.1} parent=1 // pred_check_branch
      %18 = sbr.rel (0) target = $region17
    $region16: #{tpu_custom_call.1} parent=1 // pred_region
      _
    $region17: #{tpu_custom_call.1} parent=1 // pred_fallthru
      _
    %v20 = vld [vmem:[%s1] sm:$0xf]
    %v21 = vld [vmem:[%s1 + $0x4] sm:$0xf]
    %v22 = vld [vmem:[%s1 + $0x8] sm:$0xf]
    %v23 = vld [vmem:[%s1 + $0xc] sm:$0xf]
    %v24 = vld [vmem:[%s1 + $0x10] sm:$0xf]
    %v25 = vld [vmem:[%s1 + $0x14] sm:$0xf]
    %v26 = vld [vmem:[%s1 + $0x18] sm:$0xf]
    %v27 = vld [vmem:[%s1 + $0x1c] sm:$0xf]
    %v28 = vld [vmem:[%s1 + $0x20] sm:$0xf]
    %v29 = vld [vmem:[%s1 + $0x24] sm:$0xf]
    %v30 = vld [vmem:[%s1 + $0x28] sm:$0xf]
    %v31 = vld [vmem:[%s1 + $0x2c] sm:$0xf]
    %v32 = vld [vmem:[%s1 + $0x30] sm:$0xf]
    %v33 = vld [vmem:[%s1 + $0x34] sm:$0xf]
    %v34 = vld [vmem:[%s1 + $0x38] sm:$0xf]
    %v35 = vld [vmem:[%s1 + $0x3c] sm:$0xf]
    %v36 = vld [vmem:[%s2] sm:$0xff]
    %v37 = vld [vmem:[%s2 + $0x8] sm:$0xff]
    %v38 = vld [vmem:[%s2 + $0x10] sm:$0xff]
    %v39 = vld [vmem:[%s2 + $0x18] sm:$0xff]
    %v40 = vld [vmem:[%s2 + $0x20] sm:$0xff]
    %v41 = vld [vmem:[%s2 + $0x28] sm:$0xff]
    %v42 = vld [vmem:[%s2 + $0x30] sm:$0xff]
    %v43 = vld [vmem:[%s2 + $0x38] sm:$0xff]
    %v44 = vld [vmem:[%s2 + $0x40] sm:$0xff]
    %v45 = vld [vmem:[%s2 + $0x48] sm:$0xff]
    %v46 = vld [vmem:[%s2 + $0x50] sm:$0xff]
    %v47 = vld [vmem:[%s2 + $0x58] sm:$0xff]
    %v48 = vld [vmem:[%s2 + $0x60] sm:$0xff]
    %v49 = vld [vmem:[%s2 + $0x68] sm:$0xff]
    %v50 = vld [vmem:[%s2 + $0x70] sm:$0xff]
    %v51 = vld [vmem:[%s2 + $0x78] sm:$0xff]
    %s52 = sld [smem:[#allocation2]]
    %v53 = vld [vmem:[%s0] sm:$0x3]
    %v54 = vpack.c.bf16 %v53, %v53
    %56 = vset.pattern.permute.xlu0 0
    %57 = vperm.xlu0 %56, %v36
    %v58 = vpop.permute.xlu0 %57
    %61 = vset.pattern.permute.xlu0 0
    %62 = vperm.xlu0 %61, %v37
    %v63 = vpop.permute.xlu0 %62
    %66 = vset.pattern.permute.xlu0 0
    %67 = vperm.xlu0 %66, %v38
    %v68 = vpop.permute.xlu0 %67
    %71 = vset.pattern.permute.xlu0 0
    %72 = vperm.xlu0 %71, %v39
    %v73 = vpop.permute.xlu0 %72
    %76 = vset.pattern.permute.xlu0 0
    %77 = vperm.xlu0 %76, %v40
    %v78 = vpop.permute.xlu0 %77
    %81 = vset.pattern.permute.xlu0 0
    %82 = vperm.xlu0 %81, %v41
    %v83 = vpop.permute.xlu0 %82
    %86 = vset.pattern.permute.xlu0 0
    %87 = vperm.xlu0 %86, %v42
    %v88 = vpop.permute.xlu0 %87
    %91 = vset.pattern.permute.xlu0 0
    %92 = vperm.xlu0 %91, %v43
    %v93 = vpop.permute.xlu0 %92
    %96 = vset.pattern.permute.xlu0 0
    %97 = vperm.xlu0 %96, %v44
    %v98 = vpop.permute.xlu0 %97
    %101 = vset.pattern.permute.xlu0 0
    %102 = vperm.xlu0 %101, %v45
    %v103 = vpop.permute.xlu0 %102
    %106 = vset.pattern.permute.xlu0 0
    %107 = vperm.xlu0 %106, %v46
    %v108 = vpop.permute.xlu0 %107
    %111 = vset.pattern.permute.xlu0 0
    %112 = vperm.xlu0 %111, %v47
    %v113 = vpop.permute.xlu0 %112
    %116 = vset.pattern.permute.xlu0 0
    %117 = vperm.xlu0 %116, %v48
    %v118 = vpop.permute.xlu0 %117
    %121 = vset.pattern.permute.xlu0 0
    %122 = vperm.xlu0 %121, %v49
    %v123 = vpop.permute.xlu0 %122
    %126 = vset.pattern.permute.xlu0 0
    %127 = vperm.xlu0 %126, %v50
    %v128 = vpop.permute.xlu0 %127
    %131 = vset.pattern.permute.xlu0 0
    %132 = vperm.xlu0 %131, %v51
    %v133 = vpop.permute.xlu0 %132
    %v151 = vunpack.c.l.b16 %v20
    %v152 = vunpack.c.l.b16 %v21
    %v153 = vunpack.c.l.b16 %v22
    %v154 = vunpack.c.l.b16 %v23
    %v155 = vunpack.c.l.b16 %v24
    %v156 = vunpack.c.l.b16 %v25
    %v157 = vunpack.c.l.b16 %v26
    %v158 = vunpack.c.l.b16 %v27
    %v159 = vunpack.c.l.b16 %v28
    %v160 = vunpack.c.l.b16 %v29
    %v161 = vunpack.c.l.b16 %v30
    %v162 = vunpack.c.l.b16 %v31
    %v163 = vunpack.c.l.b16 %v32
    %v164 = vunpack.c.l.b16 %v33
    %v165 = vunpack.c.l.b16 %v34
    %v166 = vunpack.c.l.b16 %v35
    %v167 = vpack.c.b16 %v152, %v151
    %v168 = vpack.c.b16 %v154, %v153
    %v169 = vpack.c.b16 %v156, %v155
    %v170 = vpack.c.b16 %v158, %v157
    %v171 = vpack.c.b16 %v160, %v159
    %v172 = vpack.c.b16 %v162, %v161
    %v173 = vpack.c.b16 %v164, %v163
    %v174 = vpack.c.b16 %v166, %v165
    %183 = vmatprep.subr.bf16.mxu0 0
    %184 = vmatpush1.bf16.xpose.msra.mxu0 %v54
    %185 = vmatprep.subr.bf16.mxu0 0
    %186 = vmatpush1.bf16.xpose.msra.mxu0 0
    %187 = vmatprep.subr.bf16.mxu0 0
    %188 = vmatpush1.bf16.xpose.msra.mxu0 0
    %189 = vmatprep.subr.bf16.mxu0 0
    %190 = vmatpush1.bf16.xpose.msra.mxu0 0
    %191 = vmatprep.subr.bf16.mxu0 0
    %192 = vmatpush1.bf16.xpose.msra.mxu0 0
    %193 = vmatprep.subr.bf16.mxu0 0
    %194 = vmatpush1.bf16.xpose.msra.mxu0 0
    %195 = vmatprep.subr.bf16.mxu0 0
    %196 = vmatpush1.bf16.xpose.msra.mxu0 0
    %197 = vmatprep.subr.bf16.mxu0 0
    %198 = vmatpush1.bf16.xpose.msra.mxu0 0
    %199 = vmatprep.subr.bf16.mxu0 0
    %200 = vmatpush1.bf16.xpose.msra.mxu0 0
    %201 = vmatprep.subr.bf16.mxu0 0
    %202 = vmatpush1.bf16.xpose.msra.mxu0 0
    %203 = vmatprep.subr.bf16.mxu0 0
    %204 = vmatpush1.bf16.xpose.msra.mxu0 0
    %205 = vmatprep.subr.bf16.mxu0 0
    %206 = vmatpush1.bf16.xpose.msra.mxu0 0
    %207 = vmatprep.subr.bf16.mxu0 0
    %208 = vmatpush1.bf16.xpose.msra.mxu0 0
    %209 = vmatprep.subr.bf16.mxu0 0
    %210 = vmatpush1.bf16.xpose.msra.mxu0 0
    %211 = vmatprep.subr.bf16.mxu0 0
    %212 = vmatpush1.bf16.xpose.msra.mxu0 0
    %213 = vmatprep.subr.bf16.mxu0 0
    %214 = vmatpush1.bf16.xpose.msra.mxu0 0
    %215 = vmatprep.mubr.bf16.mxu0 0
    %216 = vmatmul.mubr.bf16.gmra.mrb[0].mxu0 %v167
    %v217 = vpop.f32.mrb[0].mxu0
    %v218 = vadd.f32 %v58, %v217
    %v219 = vpop.f32.mrb[0].mxu0
    %v220 = vpop.f32.mrb[0].mxu0
    %v221 = vadd.f32 %v63, %v220
    %v222 = vpop.f32.mrb[0].mxu0
    %223 = vmatprep.mubr.bf16.mxu0 0
    %224 = vmatmul.mubr.bf16.gmra.mrb[0].mxu0 %v168
    %v225 = vpop.f32.mrb[0].mxu0
    %v226 = vadd.f32 %v68, %v225
    %v227 = vpop.f32.mrb[0].mxu0
    %v228 = vpop.f32.mrb[0].mxu0
    %v229 = vadd.f32 %v73, %v228
    %v230 = vpop.f32.mrb[0].mxu0
    %231 = vmatprep.mubr.bf16.mxu0 0
    %232 = vmatmul.mubr.bf16.gmra.mrb[0].mxu0 %v169
    %v233 = vpop.f32.mrb[0].mxu0
    %v234 = vadd.f32 %v78, %v233
    %v235 = vpop.f32.mrb[0].mxu0
    %v236 = vpop.f32.mrb[0].mxu0
    %v237 = vadd.f32 %v83, %v236
    %v238 = vpop.f32.mrb[0].mxu0
    %239 = vmatprep.mubr.bf16.mxu0 0
    %240 = vmatmul.mubr.bf16.gmra.mrb[0].mxu0 %v170
    %v241 = vpop.f32.mrb[0].mxu0
    %v242 = vadd.f32 %v88, %v241
    %v243 = vpop.f32.mrb[0].mxu0
    %v244 = vpop.f32.mrb[0].mxu0
    %v245 = vadd.f32 %v93, %v244
    %v246 = vpop.f32.mrb[0].mxu0
    %247 = vmatprep.mubr.bf16.mxu0 0
    %248 = vmatmul.mubr.bf16.gmra.mrb[0].mxu0 %v171
    %v249 = vpop.f32.mrb[0].mxu0
    %v250 = vadd.f32 %v98, %v249
    %v251 = vpop.f32.mrb[0].mxu0
    %v252 = vpop.f32.mrb[0].mxu0
    %v253 = vadd.f32 %v103, %v252
    %v254 = vpop.f32.mrb[0].mxu0
    %255 = vmatprep.mubr.bf16.mxu0 0
    %256 = vmatmul.mubr.bf16.gmra.mrb[0].mxu0 %v172
    %v257 = vpop.f32.mrb[0].mxu0
    %v258 = vadd.f32 %v108, %v257
    %v259 = vpop.f32.mrb[0].mxu0
    %v260 = vpop.f32.mrb[0].mxu0
    %v261 = vadd.f32 %v113, %v260
    %v262 = vpop.f32.mrb[0].mxu0
    %263 = vmatprep.mubr.bf16.mxu0 0
    %264 = vmatmul.mubr.bf16.gmra.mrb[0].mxu0 %v173
    %v265 = vpop.f32.mrb[0].mxu0
    %v266 = vadd.f32 %v118, %v265
    %v267 = vpop.f32.mrb[0].mxu0
    %v268 = vpop.f32.mrb[0].mxu0
    %v269 = vadd.f32 %v123, %v268
    %v270 = vpop.f32.mrb[0].mxu0
    %271 = vmatprep.mubr.bf16.mxu0 0
    %272 = vmatmul.mubr.bf16.gmra.mrb[0].mxu0 %v174
    %v273 = vpop.f32.mrb[0].mxu0
    %v274 = vadd.f32 %v128, %v273
    %v275 = vpop.f32.mrb[0].mxu0
    %v276 = vpop.f32.mrb[0].mxu0
    %v277 = vadd.f32 %v133, %v276
    %v278 = vpop.f32.mrb[0].mxu0
    %279 = vdwg.mxu0
    %v280 = vmax.f32 %v218, 0.0
    %v281 = vmax.f32 %v221, 0.0
    %v282 = vmax.f32 %v226, 0.0
    %v283 = vmax.f32 %v229, 0.0
    %v284 = vmax.f32 %v234, 0.0
    %v285 = vmax.f32 %v237, 0.0
    %v286 = vmax.f32 %v242, 0.0
    %v287 = vmax.f32 %v245, 0.0
    %v288 = vmax.f32 %v250, 0.0
    %v289 = vmax.f32 %v253, 0.0
    %v290 = vmax.f32 %v258, 0.0
    %v291 = vmax.f32 %v261, 0.0
    %v292 = vmax.f32 %v266, 0.0
    %v293 = vmax.f32 %v269, 0.0
    %v294 = vmax.f32 %v274, 0.0
    %v295 = vmax.f32 %v277, 0.0
    %296 = vset.pattern.permute.xlu0 1
    %297 = vperm.xlu0 %296, %v36
    %v298 = vpop.permute.xlu0 %297
    %300 = vset.pattern.permute.xlu0 1
    %301 = vperm.xlu0 %300, %v37
    %v302 = vpop.permute.xlu0 %301
    %304 = vset.pattern.permute.xlu0 1
    %305 = vperm.xlu0 %304, %v38
    %v306 = vpop.permute.xlu0 %305
    %308 = vset.pattern.permute.xlu0 1
    %309 = vperm.xlu0 %308, %v39
    %v310 = vpop.permute.xlu0 %309
    %312 = vset.pattern.permute.xlu0 1
    %313 = vperm.xlu0 %312, %v40
    %v314 = vpop.permute.xlu0 %313
    %316 = vset.pattern.permute.xlu0 1
    %317 = vperm.xlu0 %316, %v41
    %v318 = vpop.permute.xlu0 %317
    %320 = vset.pattern.permute.xlu0 1
    %321 = vperm.xlu0 %320, %v42
    %v322 = vpop.permute.xlu0 %321
    %324 = vset.pattern.permute.xlu0 1
    %325 = vperm.xlu0 %324, %v43
    %v326 = vpop.permute.xlu0 %325
    %328 = vset.pattern.permute.xlu0 1
    %329 = vperm.xlu0 %328, %v44
    %v330 = vpop.permute.xlu0 %329
    %332 = vset.pattern.permute.xlu0 1
    %333 = vperm.xlu0 %332, %v45
    %v334 = vpop.permute.xlu0 %333
    %336 = vset.pattern.permute.xlu0 1
    %337 = vperm.xlu0 %336, %v46
    %v338 = vpop.permute.xlu0 %337
    %340 = vset.pattern.permute.xlu0 1
    %341 = vperm.xlu0 %340, %v47
    %v342 = vpop.permute.xlu0 %341
    %344 = vset.pattern.permute.xlu0 1
    %345 = vperm.xlu0 %344, %v48
    %v346 = vpop.permute.xlu0 %345
    %348 = vset.pattern.permute.xlu0 1
    %349 = vperm.xlu0 %348, %v49
    %v350 = vpop.permute.xlu0 %349
    %352 = vset.pattern.permute.xlu0 1
    %353 = vperm.xlu0 %352, %v50
    %v354 = vpop.permute.xlu0 %353
    %356 = vset.pattern.permute.xlu0 1
    %357 = vperm.xlu0 %356, %v51
    %v358 = vpop.permute.xlu0 %357
    %v360 = vmul.f32 %v280, %v298
    %v361 = vmul.f32 %v281, %v302
    %v362 = vmul.f32 %v282, %v306
    %v363 = vmul.f32 %v283, %v310
    %v364 = vmul.f32 %v284, %v314
    %v365 = vmul.f32 %v285, %v318
    %v366 = vmul.f32 %v286, %v322
    %v367 = vmul.f32 %v287, %v326
    %v368 = vmul.f32 %v288, %v330
    %v369 = vmul.f32 %v289, %v334
    %v370 = vmul.f32 %v290, %v338
    %v371 = vmul.f32 %v291, %v342
    %v372 = vmul.f32 %v292, %v346
    %v373 = vmul.f32 %v293, %v350
    %v374 = vmul.f32 %v294, %v354
    %v375 = vmul.f32 %v295, %v358
    %vm376 = vcmask 15360
    %v377 = vsel %vm376, %v360, 0.0
    %v378 = vsel %vm376, %v361, 0.0
    %v379 = vadd.f32 %v377, %v378
    %v380 = vsel %vm376, %v362, 0.0
    %v381 = vadd.f32 %v379, %v380
    %v382 = vsel %vm376, %v363, 0.0
    %v383 = vadd.f32 %v381, %v382
    %v384 = vsel %vm376, %v364, 0.0
    %v385 = vadd.f32 %v383, %v384
    %v386 = vsel %vm376, %v365, 0.0
    %v387 = vadd.f32 %v385, %v386
    %v388 = vsel %vm376, %v366, 0.0
    %v389 = vadd.f32 %v387, %v388
    %v390 = vsel %vm376, %v367, 0.0
    %v391 = vadd.f32 %v389, %v390
    %v392 = vsel %vm376, %v368, 0.0
    %v393 = vadd.f32 %v391, %v392
    %v394 = vsel %vm376, %v369, 0.0
    %v395 = vadd.f32 %v393, %v394
    %v396 = vsel %vm376, %v370, 0.0
    %v397 = vadd.f32 %v395, %v396
    %v398 = vsel %vm376, %v371, 0.0
    %v399 = vadd.f32 %v397, %v398
    %v400 = vsel %vm376, %v372, 0.0
    %v401 = vadd.f32 %v399, %v400
    %v402 = vsel %vm376, %v373, 0.0
    %v403 = vadd.f32 %v401, %v402
    %v404 = vsel %vm376, %v374, 0.0
    %v405 = vadd.f32 %v403, %v404
    %v406 = vsel %vm376, %v375, 0.0
    %v407 = vadd.f32 %v405, %v406
    %v408 = vrot.slane %v407, 4
    %v409 = vadd.f32 %v407, %v408
    %v410 = vrot.slane %v409, 2
    %v411 = vadd.f32 %v409, %v410
    %v412 = vrot.slane %v411, 1
    %v413 = vadd.f32 %v411, %v412
    %v414 = vstv %s52
    %v415 = vadd.f32 %v413, %v414
    %v416 = vxor.u32 %v415, 2147483648
    %v417 = vmul.f32 %v416, 1.442695
    %v418 = vpow.pop %v417
    %v419 = vadd.f32 %v418, 1.0
    %v420 = vrcp.pop %v419
    %v421 = vmul.f32 1.0, %v420
    %vm422 = vcmask 8192
    %423 = vst.msk [vmem:[#allocation3] sm:$0x1] %vm422, %v421
    // Predicated region
    $region18: #{tpu_custom_call.1} parent=1 // pred_check
      _
    $region19: #{tpu_custom_call.1} parent=1 // pred_check_branch
      %425 = sbr.rel (0) target = $region21
    $region20: #{tpu_custom_call.1} parent=1 // pred_region
      %s427 = ssub.s32 16, 16
      %428 = vsyncadd [#allocation4], %s427
      %s430 = sshll.u32 [#allocation3], 4
      %s431 = int_to_ptr.vmem [resolvable:$true] %s430
      %433 = dma.vmem_to_hbm [thread:$0]  %s431, 16, %s4, [#allocation4]
    $region21: #{tpu_custom_call.1} parent=1 // pred_fallthru
      _
    // Predicated region
    $region22: #{tpu_custom_call.1} parent=1 // pred_check
      _
    $region23: #{tpu_custom_call.1} parent=1 // pred_check_branch
      %435 = sbr.rel (0) target = $region25
    $region24: #{tpu_custom_call.1} parent=1 // pred_region
      %436 = dma.done [#allocation4], 16
    $region25: #{tpu_custom_call.1} parent=1 // pred_fallthru
      _
    %437 = vsyncpa [#allocation4], 1

</llo_original>
